<compile_context>
chip_gen: v5e
topology: v5e:2x2
jax: 0.10.0
libtpu: 0.0.40
codegen_flags: <defaults>
</compile_context>

<pallas_src>
import jax
import jax.numpy as jnp
from jax import lax
from jax.experimental import pallas as pl
from jax.experimental.pallas import tpu as pltpu

_CHUNK = 1024  # lanes per in-kernel strip: 8-vreg accumulator + ~8 vregs of input


def _conv1x1_hardclamp_kernel(x_ref, w_ref, b_ref, o_ref):
    # x_ref: [1, Cin, TM]   w_ref: [Cout, Cin] (= W/6)   b_ref: [Cout, 1] (= (bias+8)/6)
    # o_ref: [1, Cout, TM]  computes clip(w @ x + b, 0, 1) strip by strip.
    cin = x_ref.shape[1]
    tm_blk = o_ref.shape[-1]
    w = w_ref[...]
    b = b_ref[...]

    def strip(off, size):
        x = x_ref[0, :, pl.ds(off, size)]                    # [Cin, size]
        acc = b + w[:, 0:1] * x[0:1, :]                      # [Cout, size]
        for ci in range(1, cin):                             # Cin == 3 -> 2 more VPU FMAs
            acc = acc + w[:, ci:ci + 1] * x[ci:ci + 1, :]
        o_ref[0, :, pl.ds(off, size)] = jnp.clip(acc, 0.0, 1.0).astype(o_ref.dtype)

    if tm_blk <= _CHUNK:
        strip(0, tm_blk)                                     # tiny block: one shot
    else:
        n_strips = pl.cdiv(tm_blk, _CHUNK)
        aligned = (tm_blk % _CHUNK) == 0

        def body(c, carry):
            off = c * _CHUNK
            if aligned:
                off = pl.multiple_of(off, _CHUNK)
            else:
                # clamp the last strip so it stays in-bounds (overlapping rewrite is fine)
                off = jnp.minimum(off, tm_blk - _CHUNK)
            strip(off, _CHUNK)
            return carry

        lax.fori_loop(0, n_strips, body, 0, unroll=2)


def _ceil_to(x, k):
    return ((x + k - 1) // k) * k


def model_forward(x_nchw, weight, bias, *, tm=65536):
    """x_nchw: [N, 3, H, W] f32; weight: [Cout, Cin] (1x1 conv); bias: [Cout]."""
    n, cin, h, w = x_nchw.shape
    cout = weight.shape[0]

    # Conv2d(..., 1, padding=1) with a 1x1 kernel == spatial zero-pad of the input.
    # TODO(synk): fuse this pad into the pallas_call operand read (allow_input_fusion)
    # to drop its extra HBM read+write pass; kept as a standalone XLA pad for robustness.
    x_pad = jnp.pad(x_nchw, ((0, 0), (0, 0), (1, 1), (1, 1)))
    hp, wp = h + 2, w + 2
    m = hp * wp
    x_flat = x_pad.reshape(n, cin, m)            # NCHW is channel-major: free reshape

    # clamp(z + 8, 0, 6)/6 == clamp(z/6 + (bias+8)/6, 0, 1): prescale the tiny params.
    w_mat = weight.astype(jnp.float32) * (1.0 / 6.0)                       # [Cout, Cin]
    b_mat = ((bias.astype(jnp.float32) + 8.0) * (1.0 / 6.0)).reshape(cout, 1)

    # Lane-axis tiling. Blocks stay <= the array extent; the trailing partial block is
    # masked by Pallas so no input lane-padding / output slicing is needed.
    tm = _ceil_to(max(tm, _CHUNK), _CHUNK)
    if m > tm:
        tm_eff = tm                                          # many tiles, last one partial
    elif n == 1 and m > 128:
        tm_eff = _ceil_to(-(-m // 2), 128)                   # 2 tiles -> both v7x TCs busy
    else:
        tm_eff = m                                           # one full-extent tile / image
    grid = (n, pl.cdiv(m, tm_eff))

    out_flat = pl.pallas_call(
        _conv1x1_hardclamp_kernel,
        out_shape=jax.ShapeDtypeStruct((n, cout, m), jnp.float32),
        grid_spec=pltpu.PrefetchScalarGridSpec(
            num_scalar_prefetch=0,
            grid=grid,
            in_specs=[
                pl.BlockSpec((1, cin, tm_eff), lambda b, i: (b, 0, i)),
                pl.BlockSpec((cout, cin), lambda b, i: (0, 0)),
                pl.BlockSpec((cout, 1), lambda b, i: (0, 0)),
            ],
            out_specs=pl.BlockSpec((1, cout, tm_eff), lambda b, i: (b, 0, i)),
        ),
        compiler_params=pltpu.CompilerParams(
            dimension_semantics=("parallel", "parallel"),
        ),
        cost_estimate=pl.CostEstimate(
            flops=2 * n * m * cin * cout,
            transcendentals=0,
            bytes_accessed=4 * n * m * (cin + cout),
        ),
    )(x_flat, w_mat, b_mat)

    # Contiguous last-dim reshape back to the padded NCHW output: no data movement.
    return out_flat.reshape(n, cout, hp, wp)


if __name__ == "__main__":
    key = jax.random.PRNGKey(0)
    k_x, k_w, k_b, k_x2 = jax.random.split(key, 4)

    COUT, CIN = 8, 3
    fan_in = CIN * 1 * 1
    bound = 1.0 / (fan_in ** 0.5)
    weight = jax.random.uniform(k_w, (COUT, CIN), minval=-bound, maxval=bound,
                                dtype=jnp.float32)
    bias = jax.random.uniform(k_b, (COUT,), minval=-bound, maxval=bound,
                              dtype=jnp.float32)

    def reference(x):
        xp = jnp.pad(x, ((0, 0), (0, 0), (1, 1), (1, 1)))
        y = jnp.einsum("nchw,oc->nohw", xp, weight) + bias[None, :, None, None]
        return jnp.clip(y + 8.0, 0.0, 6.0) / 6.0

    # Small multi-batch case (single full-extent tile per image).
    x_small = jax.random.normal(k_x, (2, CIN, 16, 16), dtype=jnp.float32)
    out_small = model_forward(x_small, weight, bias)
    jax.block_until_ready(out_small)
    assert out_small.shape == (2, COUT, 18, 18)
    assert jnp.allclose(out_small, reference(x_small), atol=1e-5), "mismatch (small)"

    # The module's own shape (N=1 two-tile path + in-kernel strip-mining + partial block).
    x_spec = jax.random.normal(k_x2, (1, CIN, 64, 64), dtype=jnp.float32)
    out_spec = model_forward(x_spec, weight, bias)
    jax.block_until_ready(out_spec)
    assert out_spec.shape == (1, COUT, 66, 66)
    assert jnp.allclose(out_spec, reference(x_spec), atol=1e-5), "mismatch (spec)"

    print("KERNEL_OK")
</pallas_src>

<mosaic_0001>
module attributes {stable_mosaic.version = 11 : i64} {
  func.func @_conv1x1_hardclamp_kernel(%arg0: i32, %arg1: i32, %arg2: memref<1x3x324xf32, #tpu.memory_space<vmem>>, %arg3: memref<8x3xf32, #tpu.memory_space<vmem>>, %arg4: memref<8x1xf32, #tpu.memory_space<vmem>>, %arg5: memref<1x8x324xf32, #tpu.memory_space<vmem>>) attributes {dimension_semantics = [#tpu.dimension_semantics<parallel>, #tpu.dimension_semantics<parallel>], iteration_bounds = array<i64: 2, 1>, scalar_prefetch = 0 : i64, scratch_operands = 0 : i64, tpu.core_type = #tpu.core_type<tc>, window_params = [{transform_indices = @transform_0, window_bounds = array<i64: 1, 3, 324>}, {pipeline_mode = #tpu.pipeline_mode<synchronous>, transform_indices = @transform_1, window_bounds = array<i64: 8, 3>}, {pipeline_mode = #tpu.pipeline_mode<synchronous>, transform_indices = @transform_2, window_bounds = array<i64: 8, 1>}, {transform_indices = @transform_3, window_bounds = array<i64: 1, 8, 324>}]} {
    %c0 = arith.constant 0 : index
    %c0_0 = arith.constant 0 : index
    %0 = vector.load %arg3[%c0, %c0_0] : memref<8x3xf32, #tpu.memory_space<vmem>>, vector<8x3xf32>
    %c0_1 = arith.constant 0 : index
    %c0_2 = arith.constant 0 : index
    %1 = vector.load %arg4[%c0_1, %c0_2] : memref<8x1xf32, #tpu.memory_space<vmem>>, vector<8x1xf32>
    %c0_3 = arith.constant 0 : index
    %c0_4 = arith.constant 0 : index
    %c0_5 = arith.constant 0 : index
    %2 = vector.load %arg2[%c0_3, %c0_4, %c0_5] : memref<1x3x324xf32, #tpu.memory_space<vmem>>, vector<1x3x324xf32>
    %3 = vector.shape_cast %2 : vector<1x3x324xf32> to vector<3x324xf32>
    %4 = vector.extract_strided_slice %0 {offsets = [0, 0], sizes = [8, 1], strides = [1, 1]} : vector<8x3xf32> to vector<8x1xf32>
    %5 = vector.extract_strided_slice %3 {offsets = [0, 0], sizes = [1, 324], strides = [1, 1]} : vector<3x324xf32> to vector<1x324xf32>
    %6 = vector.broadcast %4 : vector<8x1xf32> to vector<8x324xf32>
    %7 = vector.broadcast %5 : vector<1x324xf32> to vector<8x324xf32>
    %8 = arith.mulf %6, %7 : vector<8x324xf32>
    %9 = vector.broadcast %1 : vector<8x1xf32> to vector<8x324xf32>
    %10 = arith.addf %9, %8 : vector<8x324xf32>
    %11 = vector.extract_strided_slice %0 {offsets = [0, 1], sizes = [8, 1], strides = [1, 1]} : vector<8x3xf32> to vector<8x1xf32>
    %12 = vector.extract_strided_slice %3 {offsets = [1, 0], sizes = [1, 324], strides = [1, 1]} : vector<3x324xf32> to vector<1x324xf32>
    %13 = vector.broadcast %11 : vector<8x1xf32> to vector<8x324xf32>
    %14 = vector.broadcast %12 : vector<1x324xf32> to vector<8x324xf32>
    %15 = arith.mulf %13, %14 : vector<8x324xf32>
    %16 = arith.addf %10, %15 : vector<8x324xf32>
    %17 = vector.extract_strided_slice %0 {offsets = [0, 2], sizes = [8, 1], strides = [1, 1]} : vector<8x3xf32> to vector<8x1xf32>
    %18 = vector.extract_strided_slice %3 {offsets = [2, 0], sizes = [1, 324], strides = [1, 1]} : vector<3x324xf32> to vector<1x324xf32>
    %19 = vector.broadcast %17 : vector<8x1xf32> to vector<8x324xf32>
    %20 = vector.broadcast %18 : vector<1x324xf32> to vector<8x324xf32>
    %21 = arith.mulf %19, %20 : vector<8x324xf32>
    %22 = arith.addf %16, %21 : vector<8x324xf32>
    %cst = arith.constant 0.000000e+00 : f32
    %cst_6 = arith.constant 1.000000e+00 : f32
    %23 = vector.broadcast %cst : f32 to vector<8x324xf32>
    %24 = arith.maximumf %23, %22 : vector<8x324xf32>
    %25 = vector.broadcast %cst_6 : f32 to vector<8x324xf32>
    %26 = arith.minimumf %25, %24 : vector<8x324xf32>
    %c0_7 = arith.constant 0 : index
    %c0_8 = arith.constant 0 : index
    %c0_9 = arith.constant 0 : index
    %27 = vector.load %arg5[%c0_7, %c0_8, %c0_9] : memref<1x8x324xf32, #tpu.memory_space<vmem>>, vector<1x8x324xf32>
    %28 = vector.shape_cast %27 : vector<1x8x324xf32> to vector<8x324xf32>
    %29 = vector.shape_cast %26 : vector<8x324xf32> to vector<1x8x324xf32>
    tpu.vector_store %arg5[%c0_7, %c0_8, %c0_9], %29 {strides = array<i32>} : memref<1x8x324xf32, #tpu.memory_space<vmem>>, vector<1x8x324xf32>,
    return
  }
  func.func @transform_0(%arg0: i32, %arg1: i32) -> (i32, i32, i32) {
    %c0_i32 = arith.constant 0 : i32
    %c0_i32_0 = arith.constant 0 : i32
    return %arg0, %c0_i32, %arg1 : i32, i32, i32
  }
  func.func @transform_1(%arg0: i32, %arg1: i32) -> (i32, i32) {
    %c0_i32 = arith.constant 0 : i32
    %c0_i32_0 = arith.constant 0 : i32
    %c0_i32_1 = arith.constant 0 : i32
    return %c0_i32, %c0_i32_0 : i32, i32
  }
  func.func @transform_2(%arg0: i32, %arg1: i32) -> (i32, i32) {
    %c0_i32 = arith.constant 0 : i32
    %c0_i32_0 = arith.constant 0 : i32
    %c0_i32_1 = arith.constant 0 : i32
    return %c0_i32, %c0_i32_0 : i32, i32
  }
  func.func @transform_3(%arg0: i32, %arg1: i32) -> (i32, i32, i32) {
    %c0_i32 = arith.constant 0 : i32
    %c0_i32_0 = arith.constant 0 : i32
    return %arg0, %c0_i32, %arg1 : i32, i32, i32
  }
}

</mosaic_0001>

<llo_original>
// kernel: tpu_custom_call.1
$region0: #{tpu_custom_call.1}
  #allocation0 [shape = 'u32[]', space=smem, size = 0x4, offset = 0x4, fixed_abs, tag = 'smem constant byte address 0x4 - core index']
  #allocation1 [shape = 'u32[72,128]{1,0:T(1,128)}', space=vmem, size = 0x9000, scoped, tag = 'internal scratch']
  %s0 = inlined_call_operand.vmem [shape: f32[2,3,324], index: 0, kind: input, shape index: {}]
  %s1 = inlined_call_operand.vmem [shape: f32[8,3], index: 1, kind: input, shape index: {}]
  %s2 = inlined_call_operand.vmem [shape: f32[8,1], index: 2, kind: input, shape index: {}]
  %s3 = inlined_call_operand.hbm [shape: f32[2,8,324], index: 3, kind: output, shape index: {}]
  %s4 = sld [smem:[#allocation0]]
  $region45: #{tpu_custom_call.1} parent=0
    _
  %s6 = ssub.s32 1, %s4
  %s7 = scalar_select 0, %s6, %s4
  $region1: #{tpu_custom_call.1} parent=0
    #allocation2 [shape = 'u8[24576]{0}', space=vmem, size = 0x6000, scoped, tag = 'output window, operand 0']
    #allocation3 [shape = 's32[2]{0}', space=sflag, size = 0x8, scoped, tag = 'scoped memory for tpu_custom_call.1']
    %8 = vsyncpa [#allocation3], 0
    %s9 = scalar_lea.sflag [#allocation3], 1
    %10 = vsyncpa %s9, 0
    loop: start=0, step=1, limit=4
    $region2: #{tpu_custom_call.1} parent=1 // loop_pre_header
      _
    $region3: #{tpu_custom_call.1} parent=1 // loop_header
      %s12 = sphi 0, %s16
      %p13 = scmp.ge.s32.totalorder %s12, 4
      %s19 = sphi 0, %s31
      %s20 = sphi 0, %s27
      %s21 = sphi 0, %s19
      %s22 = sphi 0, %s20
      %s23 = sphi 0, %s21
      %s24 = sphi 0, %s22
      %s36 = sphi 0, %s38
      %s39 = sphi 0, %s36
      %s40 = sphi 0, %s39
      %s56 = sphi 0, %s40
      %s60 = sphi 0, %s60
      %s62 = sphi 0, %s60
      %s63 = sphi 0, %s62
      %s77 = sphi 0, %s63
      %s81 = sphi 0, %s81
      %s83 = sphi 0, %s81
      %s84 = sphi 0, %s83
      %s98 = sphi 0, %s84
      %s106 = sphi 0, %s108
      %s109 = sphi 0, %s106
      %s110 = sphi 0, %s109
      %s126 = sphi 0, %s110
    $region4: #{tpu_custom_call.1} parent=1 // loop_header_branch
      %15 = sbr.rel (%p13) target = $region8
    $region5: #{tpu_custom_call.1} parent=1 // loop_body
      %s17 = ssub.s32 %s12, 1
      %s18 = ssub.s32 %s12, 2
      %s25 = sadd.s32 1, %s20
      %p26 = scmp.ge.s32.totalorder %s25, 1
      %s27 = scalar_select %p26, 0, %s25
      %s28 = sadd.s32 1, %s19
      %s29 = scalar_select %p26, %s28, %s19
      %p30 = scmp.ge.s32.totalorder %s29, 2
      %s31 = scalar_select %p30, 0, %s29
      %s32 = ssub.s32 %s19, %s31
      %s33 = ssub.s32 %s20, %s27
      %s34 = sor.u32 %s32, %s33
      %p35 = scmp.eq.s32.totalorder %s34, 0
      %s37 = sadd.s32 %s36, 1
      %s38 = scalar_select %p35, %s36, %s37
      %p41 = pneg %p35
      %p42 = scmp.eq.s32.totalorder %s12, 1
      %p43 = por %p41, %p42
      %p44 = scmp.ne.s32.totalorder %s36, %s39
      %p45 = scmp.eq.s32.totalorder %s12, 0
      %p46 = por %p44, %p45
      %p47 = scmp.ne.s32.totalorder %s36, %s39
      %p48 = scmp.eq.s32.totalorder %s17, 1
      %p49 = por %p47, %p48
      %p50 = scmp.ne.s32.totalorder %s39, %s40
      %p51 = scmp.eq.s32.totalorder %s17, 0
      %p52 = por %p50, %p51
      %p53 = scmp.ne.s32.totalorder %s39, %s40
      %p54 = scmp.eq.s32.totalorder %s18, 1
      %p55 = por %p53, %p54
      %p57 = scmp.ne.s32.totalorder %s40, %s56
      %p58 = scmp.eq.s32.totalorder %s18, 0
      %p59 = por %p57, %p58
      %s61 = sadd.s32 %s60, 1
      %p64 = scmp.eq.s32.totalorder %s12, 1
      %p65 = scmp.ne.s32.totalorder %s60, %s62
      %p66 = scmp.eq.s32.totalorder %s12, 0
      %p67 = por %p65, %p66
      %p68 = scmp.ne.s32.totalorder %s60, %s62
      %p69 = scmp.eq.s32.totalorder %s17, 1
      %p70 = por %p68, %p69
      %p71 = scmp.ne.s32.totalorder %s62, %s63
      %p72 = scmp.eq.s32.totalorder %s17, 0
      %p73 = por %p71, %p72
      %p74 = scmp.ne.s32.totalorder %s62, %s63
      %p75 = scmp.eq.s32.totalorder %s18, 1
      %p76 = por %p74, %p75
      %p78 = scmp.ne.s32.totalorder %s63, %s77
      %p79 = scmp.eq.s32.totalorder %s18, 0
      %p80 = por %p78, %p79
      %s82 = sadd.s32 %s81, 1
      %p85 = scmp.eq.s32.totalorder %s12, 1
      %p86 = scmp.ne.s32.totalorder %s81, %s83
      %p87 = scmp.eq.s32.totalorder %s12, 0
      %p88 = por %p86, %p87
      %p89 = scmp.ne.s32.totalorder %s81, %s83
      %p90 = scmp.eq.s32.totalorder %s17, 1
      %p91 = por %p89, %p90
      %p92 = scmp.ne.s32.totalorder %s83, %s84
      %p93 = scmp.eq.s32.totalorder %s17, 0
      %p94 = por %p92, %p93
      %p95 = scmp.ne.s32.totalorder %s83, %s84
      %p96 = scmp.eq.s32.totalorder %s18, 1
      %p97 = por %p95, %p96
      %p99 = scmp.ne.s32.totalorder %s84, %s98
      %p100 = scmp.eq.s32.totalorder %s18, 0
      %p101 = por %p99, %p100
      %s102 = ssub.s32 %s19, %s31
      %s103 = ssub.s32 %s20, %s27
      %s104 = sor.u32 %s102, %s103
      %p105 = scmp.eq.s32.totalorder %s104, 0
      %s107 = sadd.s32 %s106, 1
      %s108 = scalar_select %p105, %s106, %s107
      %p111 = pneg %p105
      %p112 = scmp.eq.s32.totalorder %s12, 1
      %p113 = por %p111, %p112
      %p114 = scmp.ne.s32.totalorder %s106, %s109
      %p115 = scmp.eq.s32.totalorder %s12, 0
      %p116 = por %p114, %p115
      %p117 = scmp.ne.s32.totalorder %s106, %s109
      %p118 = scmp.eq.s32.totalorder %s17, 1
      %p119 = por %p117, %p118
      %p120 = scmp.ne.s32.totalorder %s109, %s110
      %p121 = scmp.eq.s32.totalorder %s17, 0
      %p122 = por %p120, %p121
      %p123 = scmp.ne.s32.totalorder %s109, %s110
      %p124 = scmp.eq.s32.totalorder %s18, 1
      %p125 = por %p123, %p124
      %p127 = scmp.ne.s32.totalorder %s110, %s126
      %p128 = scmp.eq.s32.totalorder %s18, 0
      %p129 = por %p127, %p128
      %p130 = scmp.le.s32.totalorder 1, %s12
      %p131 = scmp.lt.s32.totalorder %s12, 3
      %p132 = pnand %p130, %p131
      %p133 = pneg %p132
      // Predicated region
      $region9: #{tpu_custom_call.1} parent=5 // pred_check
        _
      $region10: #{tpu_custom_call.1} parent=5 // pred_check_branch
        %135 = sbr.rel (%p132) target = $region12
      $region11: #{tpu_custom_call.1} parent=5 // pred_region
        %s136 = ssub.s32 %s12, 1
        // Predicated region
        $region13: #{tpu_custom_call.1} parent=11 // pred_check
          %p137 = pneg %p73
        $region14: #{tpu_custom_call.1} parent=11 // pred_check_branch
          %139 = sbr.rel (%p137) target = $region16
        $region15: #{tpu_custom_call.1} parent=11 // pred_region
          _
        $region16: #{tpu_custom_call.1} parent=11 // pred_fallthru
          _
        // Predicated region
        $region17: #{tpu_custom_call.1} parent=11 // pred_check
          %p140 = pneg %p94
        $region18: #{tpu_custom_call.1} parent=11 // pred_check_branch
          %142 = sbr.rel (%p140) target = $region20
        $region19: #{tpu_custom_call.1} parent=11 // pred_region
          _
        $region20: #{tpu_custom_call.1} parent=11 // pred_fallthru
          _
      $region12: #{tpu_custom_call.1} parent=5 // pred_fallthru
        _
      %p143 = scmp.lt.s32.totalorder %s12, 2
      // Predicated region
      $region21: #{tpu_custom_call.1} parent=5 // pred_check
        %p144 = pneg %p143
      $region22: #{tpu_custom_call.1} parent=5 // pred_check_branch
        %146 = sbr.rel (%p144) target = $region24
      $region23: #{tpu_custom_call.1} parent=5 // pred_region
        // Predicated region
        $region25: #{tpu_custom_call.1} parent=23 // pred_check
          %p147 = pneg %p46
        $region26: #{tpu_custom_call.1} parent=23 // pred_check_branch
          %149 = sbr.rel (%p147) target = $region28
        $region27: #{tpu_custom_call.1} parent=23 // pred_region
          %s150 = smul.u32 3, %s20
          %p151 = scmp.lt.s32.totalorder %s19, 1
          %s152 = scalar_select %p151, %s19, 1
          %p153 = scmp.lt.s32.totalorder %s150, 2
          %s154 = scalar_select %p153, %s150, 2
          %s155 = smul.addr %s152, 3
          %s156 = sadd.s32 %s154, %s155
          %s157 = smul.addr %s156, 4
          %s158 = scalar_lea.vmem %s0, %s157
          %s159 = smul.u32 3, %s20
        $region28: #{tpu_custom_call.1} parent=23 // pred_fallthru
          _
      $region24: #{tpu_custom_call.1} parent=5 // pred_fallthru
        _
      %p160 = scmp.le.s32.totalorder 1, %s12
      %p161 = scmp.lt.s32.totalorder %s12, 3
      %p162 = pnand %p160, %p161
      %p163 = pneg %p162
      // Predicated region
      $region29: #{tpu_custom_call.1} parent=5 // pred_check
        _
      $region30: #{tpu_custom_call.1} parent=5 // pred_check_branch
        %165 = sbr.rel (%p162) target = $region32
      $region31: #{tpu_custom_call.1} parent=5 // pred_region
        %s166 = ssub.s32 %s12, 1
        %s167 = smul.u32 3, %s22
        %p168 = scmp.lt.s32.totalorder %s21, 1
        %s169 = scalar_select %p168, %s21, 1
        %p170 = scmp.lt.s32.totalorder %s167, 2
        %s171 = scalar_select %p170, %s167, 2
        %s172 = smul.addr %s169, 3
        %s173 = sadd.s32 %s171, %s172
        %s174 = smul.addr %s173, 4
        %s175 = scalar_lea.vmem %s0, %s174
        %p176 = pneg %p52
        %p177 = pneg %p49
        %p178 = pneg %p73
        %p179 = pneg %p70
        %p180 = pneg %p94
        %p181 = pneg %p91
        %p182 = pneg %p122
        %p183 = pneg %p119
        %s184 = sand.u32 %s109, 1
        %s185 = scalar_lea.sflag [#allocation3], %s184
        %s186 = sand.u32 %s109, 1
        %s187 = smul.addr %s186, 24
        %s188 = scalar_lea.vmem [#allocation2], %s187
        %s189 = smul.u32 3, %s22
        %p190 = scmp.lt.s32.totalorder %s21, 1
        %s191 = scalar_select %p190, %s21, 1
        %p192 = scmp.lt.s32.totalorder %s189, 2
        %s193 = scalar_select %p192, %s189, 2
        %s194 = smul.addr %s191, 3
        %s195 = sadd.s32 %s193, %s194
        %s196 = smul.addr %s195, 4
        %s197 = scalar_lea.vmem %s0, %s196
        %s198 = smul.u32 3, %s22
        %s199 = smul.u32 3, %s22
        %v200 = vld [vmem:[%s1] sm:$0xff]
        %v201 = vld [vmem:[%s2] sm:$0xff]
        %v202 = vld [vmem:[%s197] sm:$0x77]
        %v203 = vld [vmem:[%s197 + $0x8] sm:$0x7]
        %205 = vset.pattern.permute.xlu0 0
        %206 = vperm.xlu0 %205, %v200
        %v207 = vpop.permute.xlu0 %206
        %v211 = vperm.slane %v202, 0
        %v212 = vperm.slane %v202, 4
        %v213 = vperm.slane %v203, 0
        %v217 = vperm.slane %v211, 0
        %v218 = vperm.slane %v212, 0
        %v219 = vperm.slane %v213, 0
        %v220 = vmul.f32 %v207, %v217
        %v221 = vmul.f32 %v207, %v218
        %v222 = vmul.f32 %v207, %v219
        %224 = vset.pattern.permute.xlu0 0
        %225 = vperm.xlu0 %224, %v201
        %v226 = vpop.permute.xlu0 %225
        %v228 = vadd.f32 %v226, %v220
        %v229 = vadd.f32 %v226, %v221
        %v230 = vadd.f32 %v226, %v222
        %231 = vset.pattern.permute.xlu0 1
        %232 = vperm.xlu0 %231, %v200
        %v233 = vpop.permute.xlu0 %232
        %v235 = vperm.slane %v202, 1
        %v236 = vperm.slane %v202, 5
        %v237 = vperm.slane %v203, 1
        %v241 = vperm.slane %v235, 1
        %v242 = vperm.slane %v236, 1
        %v243 = vperm.slane %v237, 1
        %v244 = vmul.f32 %v233, %v241
        %v245 = vmul.f32 %v233, %v242
        %v246 = vmul.f32 %v233, %v243
        %v247 = vadd.f32 %v228, %v244
        %v248 = vadd.f32 %v229, %v245
        %v249 = vadd.f32 %v230, %v246
        %250 = vset.pattern.permute.xlu0 2
        %251 = vperm.xlu0 %250, %v200
        %v252 = vpop.permute.xlu0 %251
        %v254 = vperm.slane %v202, 2
        %v255 = vperm.slane %v202, 6
        %v256 = vperm.slane %v203, 2
        %v260 = vperm.slane %v254, 2
        %v261 = vperm.slane %v255, 2
        %v262 = vperm.slane %v256, 2
        %v263 = vmul.f32 %v252, %v260
        %v264 = vmul.f32 %v252, %v261
        %v265 = vmul.f32 %v252, %v262
        %v266 = vadd.f32 %v247, %v263
        %v267 = vadd.f32 %v248, %v264
        %v268 = vadd.f32 %v249, %v265
        %v269 = vmax.f32 %v266, 0.0
        %v270 = vmax.f32 %v267, 0.0
        %v271 = vmax.f32 %v268, 0.0
        %v272 = vmin.f32 %v269, 1.0
        %v273 = vmin.f32 %v270, 1.0
        %v274 = vmin.f32 %v271, 1.0
        %275 = vst [vmem:[%s188] sm:$0xff] %v272
        %276 = vst [vmem:[%s188 + $0x8] sm:$0xff] %v273
        %vm277 = vcmask 556032
        %278 = vst.msk [vmem:[%s188 + $0x10] sm:$0xff] %vm277, %v274
        %s279 = sand.u32 %s109, 1
        %s280 = scalar_lea.sflag [#allocation3], %s279
        %s281 = sand.u32 %s109, 1
        %s282 = smul.addr %s281, 24
        %s283 = scalar_lea.vmem [#allocation2], %s282
        // Predicated region
        $region33: #{tpu_custom_call.1} parent=31 // pred_check
          %p284 = pneg %p119
        $region34: #{tpu_custom_call.1} parent=31 // pred_check_branch
          %286 = sbr.rel (%p284) target = $region36
        $region35: #{tpu_custom_call.1} parent=31 // pred_region
          %s287 = smul.u32 3, %s22
          %289 = vsyncadd %s280, 0
          %s290 = smul.addr %s21, 3
          %s291 = sadd.s32 %s287, %s290
          %s292 = smul.addr %s291, 8
          %s293 = scalar_lea.hbm %s3, %s292
          %s295 = sshll.u32 %s283, 4
          %s296 = int_to_ptr.vmem [resolvable:$true] %s295
          %s297 = sshll.u32 %s293, 4
          %s298 = int_to_ptr.hbm [resolvable:$true] %s297
          %300 = dma.vmem_to_hbm [thread:$0]  %s296, 384, %s298, %s280
        $region36: #{tpu_custom_call.1} parent=31 // pred_fallthru
          _
      $region32: #{tpu_custom_call.1} parent=5 // pred_fallthru
        _
      %p301 = scmp.le.s32.totalorder 2, %s12
      // Predicated region
      $region37: #{tpu_custom_call.1} parent=5 // pred_check
        %p302 = pneg %p301
      $region38: #{tpu_custom_call.1} parent=5 // pred_check_branch
        %304 = sbr.rel (%p302) target = $region40
      $region39: #{tpu_custom_call.1} parent=5 // pred_region
        %s305 = ssub.s32 %s12, 2
        // Predicated region
        $region41: #{tpu_custom_call.1} parent=39 // pred_check
          %p306 = pneg %p125
        $region42: #{tpu_custom_call.1} parent=39 // pred_check_branch
          %308 = sbr.rel (%p306) target = $region44
        $region43: #{tpu_custom_call.1} parent=39 // pred_region
          %s309 = sand.u32 %s110, 1
          %s310 = scalar_lea.sflag [#allocation3], %s309
          %s311 = sand.u32 %s110, 1
          %s312 = smul.addr %s311, 24
          %s313 = scalar_lea.vmem [#allocation2], %s312
          %315 = dma.done %s310, 384
        $region44: #{tpu_custom_call.1} parent=39 // pred_fallthru
          _
      $region40: #{tpu_custom_call.1} parent=5 // pred_fallthru
        _
    $region6: #{tpu_custom_call.1} parent=1 // loop_footer
      %s16 = sadd.s32 1, %s12
    $region7: #{tpu_custom_call.1} parent=1 // loop_footer_branch
      %11 = sbr.rel target = $region3
    $region8: #{tpu_custom_call.1} parent=1 // loop_exit
      _
    %316 = vsyncpa [#allocation3], 1
    %s317 = scalar_lea.sflag [#allocation3], 1
    %318 = vsyncpa %s317, 1

</llo_original>
